<compile_context>
chip_gen: v7x
topology: tpu7x:2x2x1
jax: 0.10.0
libtpu: 0.0.40
codegen_flags: <defaults>
</compile_context>

<pallas_src>
import functools

import jax
import jax.numpy as jnp
from jax.experimental import pallas as pl
from jax.experimental.pallas import tpu as pltpu


def _round_up(a, b):
    return (a + b - 1) // b * b


def channel_attention_kernel(x_ref, w1_ref, w2_ref, o_ref, sum_acc, max_acc,
                             *, hw_true, t_hw, needs_mask):
    # x_ref: (TB, C, T_HW)   w1_ref: (Cr, C)   w2_ref: (C, Cr)
    # o_ref: (TB, C)         sum_acc/max_acc: (TB, C) f32 scratch
    hw_id = pl.program_id(1)
    n_hw = pl.num_programs(1)

    @pl.when(hw_id == 0)
    def _():
        sum_acc[...] = jnp.zeros_like(sum_acc)
        max_acc[...] = jnp.full_like(max_acc, -jnp.inf)

    x = x_ref[...]  # (TB, C, T_HW) f32

    if needs_mask:
        # Last HW tile is ragged: pad lanes contribute 0 to the sum and -inf to the max.
        lane = jax.lax.broadcasted_iota(jnp.int32, x.shape, 2)
        valid = (hw_id * t_hw + lane) < hw_true
        x_sum = jnp.where(valid, x, 0.0)
        x_max = jnp.where(valid, x, -jnp.inf)
    else:
        x_sum = x
        x_max = x

    sum_acc[...] = sum_acc[...] + jnp.sum(x_sum, axis=-1)                 # (TB, C)
    max_acc[...] = jnp.maximum(max_acc[...], jnp.max(x_max, axis=-1))     # (TB, C)

    @pl.when(hw_id == n_hw - 1)
    def _():
        avg = sum_acc[...] * (1.0 / hw_true)   # true H*W, not padded count
        mx = max_acc[...]
        tb = avg.shape[0]

        # Fused shared MLP: one first-layer matmul for both pooled vectors,
        # then add hidden activations (second conv is linear) -> one second matmul.
        p = jnp.concatenate([avg, mx], axis=0)                       # (2*TB, C)
        h = jax.lax.dot_general(p, w1_ref[...],
                                (((1,), (1,)), ((), ())),
                                preferred_element_type=jnp.float32)  # (2*TB, Cr)
        h = jnp.maximum(h, 0.0)                                      # ReLU
        h_sum = h[:tb] + h[tb:]                                      # (TB, Cr)
        out = jax.lax.dot_general(h_sum, w2_ref[...],
                                  (((1,), (1,)), ((), ())),
                                  preferred_element_type=jnp.float32)  # (TB, C)
        o_ref[...] = jax.nn.sigmoid(out).astype(o_ref.dtype)


def channel_attention(x, w1, w2, *, tb=None, t_hw=None, vmem_limit_bytes=None):
    """x: (N, C, H, W); w1: (C//r, C); w2: (C, C//r). Returns (N, C, 1, 1) float32."""
    N, C, H, W = x.shape
    Cr = w1.shape[0]
    HW = H * W

    xf = x.reshape(N, C, HW).astype(jnp.float32)
    w1 = w1.astype(jnp.float32)
    w2 = w2.astype(jnp.float32)

    # --- batch tile: multiple of 8 (sublane-friendly output block); grow it when
    # the spatial extent is small so each x tile still carries a decent DMA.
    if tb is None:
        tb = 8
        while tb < 64 and tb < N and tb * C * HW * 4 < (1 << 20):
            tb *= 2
    tb = max(8, _round_up(tb, 8))
    Np = _round_up(N, tb)

    # --- HW tile: target ~4 MiB per x buffer (double-buffered -> ~8 MiB, safely
    # inside the default scoped VMEM on v5e/v6e/v7x). Multiple of 128 when tiling.
    if t_hw is None:
        target_elems = (4 << 20) // (tb * C * 4)
        t_hw = max(128, (target_elems // 128) * 128)
    if t_hw >= HW:
        t_hw = HW            # single block equal to the full spatial dim
        HWp = HW
        needs_mask = False
    else:
        t_hw = max(128, (t_hw // 128) * 128)
        HWp = _round_up(HW, t_hw)
        needs_mask = (HW % t_hw) != 0

    xp = jnp.pad(xf, ((0, Np - N), (0, 0), (0, HWp - HW)))

    grid = (Np // tb, HWp // t_hw)

    cp_kwargs = dict(dimension_semantics=("parallel", "arbitrary"))
    if vmem_limit_bytes is not None:
        cp_kwargs["vmem_limit_bytes"] = vmem_limit_bytes

    kernel = functools.partial(channel_attention_kernel,
                               hw_true=HW, t_hw=t_hw, needs_mask=needs_mask)

    out = pl.pallas_call(
        kernel,
        out_shape=jax.ShapeDtypeStruct((Np, C), jnp.float32),
        grid=grid,
        in_specs=[
            pl.BlockSpec((tb, C, t_hw), lambda b, hw: (b, 0, hw)),
            pl.BlockSpec((Cr, C), lambda b, hw: (0, 0)),
            pl.BlockSpec((C, Cr), lambda b, hw: (0, 0)),
        ],
        out_specs=pl.BlockSpec((tb, C), lambda b, hw: (b, 0)),
        scratch_shapes=[
            pltpu.VMEM((tb, C), jnp.float32),   # running sum
            pltpu.VMEM((tb, C), jnp.float32),   # running max
        ],
        compiler_params=pltpu.CompilerParams(**cp_kwargs),
    )(xp, w1, w2)

    return out[:N].reshape(N, C, 1, 1)


def channel_attention_ref(x, w1, w2):
    """Pure-JAX reference matching the PyTorch forward."""
    avg = jnp.mean(x, axis=(2, 3))                 # (N, C)
    mx = jnp.max(x, axis=(2, 3))                   # (N, C)

    def mlp(v):                                    # (N, C)
        h = jnp.maximum(v @ w1.T, 0.0)             # (N, Cr)
        return h @ w2.T                            # (N, C)

    out = jax.nn.sigmoid(mlp(avg) + mlp(mx))
    return out[:, :, None, None]


if __name__ == "__main__":
    key = jax.random.PRNGKey(0)
    k_x, k_w1, k_w2 = jax.random.split(key, 3)

    # Small shapes consistent with the module: channel >= ratio.
    N, C, H, W = 4, 32, 16, 16
    ratio = 16
    Cr = C // ratio

    x = jax.random.normal(k_x, (N, C, H, W), dtype=jnp.float32)
    # Deterministic synthetic weights (nn.Conv2d(C, C//r, 1) / (C//r, C, 1) with (1,1) squeezed).
    w1 = jax.random.normal(k_w1, (Cr, C), dtype=jnp.float32) * 0.1
    w2 = jax.random.normal(k_w2, (C, Cr), dtype=jnp.float32) * 0.1

    out = channel_attention(x, w1, w2)
    out = jax.block_until_ready(out)
    ref = channel_attention_ref(x, w1, w2)
    assert out.shape == (N, C, 1, 1)
    assert jnp.allclose(out, ref, atol=1e-5, rtol=1e-5), "mismatch vs reference"

    # Also exercise the HW-tiled + masked-tail reduction path (HW=169, T_HW=128).
    x2 = jax.random.normal(k_x, (3, C, 13, 13), dtype=jnp.float32)
    out2 = jax.block_until_ready(channel_attention(x2, w1, w2, t_hw=128))
    ref2 = channel_attention_ref(x2, w1, w2)
    assert out2.shape == (3, C, 1, 1)
    assert jnp.allclose(out2, ref2, atol=1e-5, rtol=1e-5), "mismatch vs reference (tiled path)"

    print("KERNEL_OK")
</pallas_src>

<mosaic_0001>
module attributes {stable_mosaic.version = 11 : i64} {
  func.func @channel_attention_kernel(%arg0: i32, %arg1: i32, %arg2: memref<8x32x256xf32, #tpu.memory_space<vmem>>, %arg3: memref<2x32xf32, #tpu.memory_space<vmem>>, %arg4: memref<32x2xf32, #tpu.memory_space<vmem>>, %arg5: memref<8x32xf32, #tpu.memory_space<vmem>>, %arg6: memref<8x32xf32, #tpu.memory_space<vmem>>, %arg7: memref<8x32xf32, #tpu.memory_space<vmem>>) attributes {dimension_semantics = [#tpu.dimension_semantics<parallel>, #tpu.dimension_semantics<arbitrary>], iteration_bounds = array<i64: 1, 1>, scalar_prefetch = 0 : i64, scratch_operands = 2 : i64, tpu.core_type = #tpu.core_type<tc>, window_params = [{transform_indices = @transform_0, window_bounds = array<i64: 8, 32, 256>}, {pipeline_mode = #tpu.pipeline_mode<synchronous>, transform_indices = @transform_1, window_bounds = array<i64: 2, 32>}, {pipeline_mode = #tpu.pipeline_mode<synchronous>, transform_indices = @transform_2, window_bounds = array<i64: 32, 2>}, {transform_indices = @transform_3, window_bounds = array<i64: 8, 32>}]} {
    %c0_i32 = arith.constant 0 : i32
    %0 = arith.cmpi eq, %arg1, %c0_i32 : i32
    %1 = arith.extui %0 : i1 to i32
    %c0_i32_0 = arith.constant 0 : i32
    %2 = arith.cmpi ne, %1, %c0_i32_0 : i32
    scf.if %2 {
      %cst_14 = arith.constant 0.000000e+00 : f32
      %15 = vector.broadcast %cst_14 : f32 to vector<8x32xf32>
      %c0_15 = arith.constant 0 : index
      %c0_16 = arith.constant 0 : index
      %16 = vector.load %arg6[%c0_15, %c0_16] : memref<8x32xf32, #tpu.memory_space<vmem>>, vector<8x32xf32>
      tpu.vector_store %arg6[%c0_15, %c0_16], %15 {strides = array<i32>} : memref<8x32xf32, #tpu.memory_space<vmem>>, vector<8x32xf32>,
      %cst_17 = arith.constant 0xFF800000 : f32
      %17 = vector.broadcast %cst_17 : f32 to vector<8x32xf32>
      %c0_18 = arith.constant 0 : index
      %c0_19 = arith.constant 0 : index
      %18 = vector.load %arg7[%c0_18, %c0_19] : memref<8x32xf32, #tpu.memory_space<vmem>>, vector<8x32xf32>
      tpu.vector_store %arg7[%c0_18, %c0_19], %17 {strides = array<i32>} : memref<8x32xf32, #tpu.memory_space<vmem>>, vector<8x32xf32>,
    } else {
    }
    %c0 = arith.constant 0 : index
    %c0_1 = arith.constant 0 : index
    %c0_2 = arith.constant 0 : index
    %3 = vector.load %arg2[%c0, %c0_1, %c0_2] : memref<8x32x256xf32, #tpu.memory_space<vmem>>, vector<8x32x256xf32>
    %c0_3 = arith.constant 0 : index
    %c0_4 = arith.constant 0 : index
    %4 = vector.load %arg6[%c0_3, %c0_4] : memref<8x32xf32, #tpu.memory_space<vmem>>, vector<8x32xf32>
    %cst = arith.constant dense<0.000000e+00> : vector<8x32xf32>
    %5 = vector.multi_reduction <add>, %3, %cst [2] : vector<8x32x256xf32> to vector<8x32xf32>
    %6 = arith.addf %4, %5 : vector<8x32xf32>
    %c0_5 = arith.constant 0 : index
    %c0_6 = arith.constant 0 : index
    %7 = vector.load %arg6[%c0_5, %c0_6] : memref<8x32xf32, #tpu.memory_space<vmem>>, vector<8x32xf32>
    tpu.vector_store %arg6[%c0_5, %c0_6], %6 {strides = array<i32>} : memref<8x32xf32, #tpu.memory_space<vmem>>, vector<8x32xf32>,
    %c0_7 = arith.constant 0 : index
    %c0_8 = arith.constant 0 : index
    %8 = vector.load %arg7[%c0_7, %c0_8] : memref<8x32xf32, #tpu.memory_space<vmem>>, vector<8x32xf32>
    %cst_9 = arith.constant dense<0xFF800000> : vector<8x32xf32>
    %9 = vector.multi_reduction <maximumf>, %3, %cst_9 [2] : vector<8x32x256xf32> to vector<8x32xf32>
    %10 = arith.maximumf %8, %9 : vector<8x32xf32>
    %c0_10 = arith.constant 0 : index
    %c0_11 = arith.constant 0 : index
    %11 = vector.load %arg7[%c0_10, %c0_11] : memref<8x32xf32, #tpu.memory_space<vmem>>, vector<8x32xf32>
    tpu.vector_store %arg7[%c0_10, %c0_11], %10 {strides = array<i32>} : memref<8x32xf32, #tpu.memory_space<vmem>>, vector<8x32xf32>,
    %c0_i32_12 = arith.constant 0 : i32
    %12 = arith.cmpi eq, %arg1, %c0_i32_12 : i32
    %13 = arith.extui %12 : i1 to i32
    %c0_i32_13 = arith.constant 0 : i32
    %14 = arith.cmpi ne, %13, %c0_i32_13 : i32
    scf.if %14 {
      %c0_14 = arith.constant 0 : index
      %c0_15 = arith.constant 0 : index
      %15 = vector.load %arg6[%c0_14, %c0_15] : memref<8x32xf32, #tpu.memory_space<vmem>>, vector<8x32xf32>
      %cst_16 = arith.constant 3.906250e-03 : f32
      %16 = vector.broadcast %cst_16 : f32 to vector<8x32xf32>
      %17 = arith.mulf %15, %16 : vector<8x32xf32>
      %c0_17 = arith.constant 0 : index
      %c0_18 = arith.constant 0 : index
      %18 = vector.load %arg7[%c0_17, %c0_18] : memref<8x32xf32, #tpu.memory_space<vmem>>, vector<8x32xf32>
      %19 = tpu.concatenate %17, %18 in 0 : vector<8x32xf32>, vector<8x32xf32> -> vector<16x32xf32>
      %c0_19 = arith.constant 0 : index
      %c0_20 = arith.constant 0 : index
      %20 = vector.load %arg3[%c0_19, %c0_20] : memref<2x32xf32, #tpu.memory_space<vmem>>, vector<2x32xf32>
      %cst_21 = arith.constant dense<0.000000e+00> : vector<16x2xf32>
      %21 = tpu.matmul %19, %20, %cst_21 {dimension_numbers = #tpu.dot_dimension_numbers<[1], [1], [0], [0], [0, 0, 1, 0], [], []>} : vector<16x32xf32>, vector<2x32xf32>, vector<16x2xf32> -> vector<16x2xf32>
      %cst_22 = arith.constant 0.000000e+00 : f32
      %22 = vector.broadcast %cst_22 : f32 to vector<16x2xf32>
      %23 = arith.maximumf %21, %22 : vector<16x2xf32>
      %24 = vector.extract_strided_slice %23 {offsets = [0, 0], sizes = [8, 2], strides = [1, 1]} : vector<16x2xf32> to vector<8x2xf32>
      %25 = vector.extract_strided_slice %23 {offsets = [8, 0], sizes = [8, 2], strides = [1, 1]} : vector<16x2xf32> to vector<8x2xf32>
      %26 = arith.addf %24, %25 : vector<8x2xf32>
      %c0_23 = arith.constant 0 : index
      %c0_24 = arith.constant 0 : index
      %27 = vector.load %arg4[%c0_23, %c0_24] : memref<32x2xf32, #tpu.memory_space<vmem>>, vector<32x2xf32>
      %cst_25 = arith.constant dense<0.000000e+00> : vector<8x32xf32>
      %28 = tpu.matmul %26, %27, %cst_25 {dimension_numbers = #tpu.dot_dimension_numbers<[1], [1], [0], [0], [0, 0, 1, 0], [], []>} : vector<8x2xf32>, vector<32x2xf32>, vector<8x32xf32> -> vector<8x32xf32>
      %29 = arith.negf %28 : vector<8x32xf32>
      %30 = math.exp %29 : vector<8x32xf32>
      %cst_26 = arith.constant 1.000000e+00 : f32
      %31 = vector.broadcast %cst_26 : f32 to vector<8x32xf32>
      %32 = arith.addf %31, %30 : vector<8x32xf32>
      %33 = arith.divf %31, %32 : vector<8x32xf32>
      %c0_27 = arith.constant 0 : index
      %c0_28 = arith.constant 0 : index
      %34 = vector.load %arg5[%c0_27, %c0_28] : memref<8x32xf32, #tpu.memory_space<vmem>>, vector<8x32xf32>
      tpu.vector_store %arg5[%c0_27, %c0_28], %33 {strides = array<i32>} : memref<8x32xf32, #tpu.memory_space<vmem>>, vector<8x32xf32>,
    } else {
    }
    return
  }
  func.func @transform_0(%arg0: i32, %arg1: i32) -> (i32, i32, i32) {
    %c0_i32 = arith.constant 0 : i32
    %c0_i32_0 = arith.constant 0 : i32
    return %arg0, %c0_i32, %arg1 : i32, i32, i32
  }
  func.func @transform_1(%arg0: i32, %arg1: i32) -> (i32, i32) {
    %c0_i32 = arith.constant 0 : i32
    %c0_i32_0 = arith.constant 0 : i32
    %c0_i32_1 = arith.constant 0 : i32
    return %c0_i32, %c0_i32_0 : i32, i32
  }
  func.func @transform_2(%arg0: i32, %arg1: i32) -> (i32, i32) {
    %c0_i32 = arith.constant 0 : i32
    %c0_i32_0 = arith.constant 0 : i32
    %c0_i32_1 = arith.constant 0 : i32
    return %c0_i32, %c0_i32_0 : i32, i32
  }
  func.func @transform_3(%arg0: i32, %arg1: i32) -> (i32, i32) {
    %c0_i32 = arith.constant 0 : i32
    %c0_i32_0 = arith.constant 0 : i32
    return %arg0, %c0_i32 : i32, i32
  }
}

</mosaic_0001>

<llo_original>
// kernel: tpu_custom_call.1
$region0: #{tpu_custom_call.1}
  #allocation0 [shape = 'u32[]', space=smem, size = 0x4, offset = 0x4, fixed_abs, tag = 'smem constant byte address 0x4 - core index']
  #allocation1 [shape = 'u32[144,128]{1,0:T(1,128)}', space=vmem, size = 0x12000, scoped, tag = 'internal scratch']
  #allocation2 [shape = 'f32[8,32]{1,0:T(8,128)}', space=vmem, size = 0x1000, scoped, tag = 'scratch operand']
  #allocation3 [shape = 'f32[8,32]{1,0:T(8,128)}', space=vmem, size = 0x1000, scoped, tag = 'scratch operand']
  %s0 = inlined_call_operand.hbm [shape: f32[8,32,256], index: 0, kind: input, shape index: {}]
  %s1 = inlined_call_operand.vmem [shape: f32[2,32], index: 1, kind: input, shape index: {}]
  %s2 = inlined_call_operand.vmem [shape: f32[32,2], index: 2, kind: input, shape index: {}]
  %s3 = inlined_call_operand.hbm [shape: f32[8,32], index: 3, kind: output, shape index: {}]
  %s4 = sld [smem:[#allocation0]]
  $region34: #{tpu_custom_call.1} parent=0
    _
  %s6 = ssub.s32 1, %s4
  %s7 = scalar_select 0, %s6, %s4
  $region1: #{tpu_custom_call.1} parent=0
    #allocation4 [shape = 'u8[262144]{0}', space=vmem, size = 0x40000, scoped, tag = 'input window, operand 0, single buffered']
    #allocation5 [shape = 's32[1]{0}', space=sflag, size = 0x4, scoped, tag = 'scoped memory for tpu_custom_call.1']
    #allocation6 [shape = 's32[1]{0}', space=sflag, size = 0x4, scoped, tag = 'scoped memory for tpu_custom_call.1']
    #allocation7 [shape = 'u8[4096]{0}', space=vmem, size = 0x1000, scoped, tag = 'output window, operand 0, single buffered']
    %8 = vsyncpa [#allocation5], 0
    %9 = vsyncpa [#allocation6], 0
    // Predicated region
    $region2: #{tpu_custom_call.1} parent=1 // pred_check
      _
    $region3: #{tpu_custom_call.1} parent=1 // pred_check_branch
      %11 = sbr.rel (0) target = $region5
    $region4: #{tpu_custom_call.1} parent=1 // pred_region
      %s13 = ssub.s32 8192, 8192
      %14 = vsyncadd [#allocation5], %s13
      %s15 = sshll.u32 [#allocation4], 4
      %s16 = int_to_ptr.vmem [resolvable:$true] %s15
      %21 = dma.hbm_to_vmem [thread:$0]  %s0, 8192, %s16, [#allocation5], 256, 256, 16
    $region5: #{tpu_custom_call.1} parent=1 // pred_fallthru
      _
    // Predicated region
    $region6: #{tpu_custom_call.1} parent=1 // pred_check
      _
    $region7: #{tpu_custom_call.1} parent=1 // pred_check_branch
      %23 = sbr.rel (0) target = $region9
    $region8: #{tpu_custom_call.1} parent=1 // pred_region
      _
    $region9: #{tpu_custom_call.1} parent=1 // pred_fallthru
      _
    // Predicated region
    $region10: #{tpu_custom_call.1} parent=1 // pred_check
      _
    $region11: #{tpu_custom_call.1} parent=1 // pred_check_branch
      %25 = sbr.rel (0) target = $region13
    $region12: #{tpu_custom_call.1} parent=1 // pred_region
      _
    $region13: #{tpu_custom_call.1} parent=1 // pred_fallthru
      _
    // Predicated region
    $region14: #{tpu_custom_call.1} parent=1 // pred_check
      _
    $region15: #{tpu_custom_call.1} parent=1 // pred_check_branch
      %27 = sbr.rel (0) target = $region17
    $region16: #{tpu_custom_call.1} parent=1 // pred_region
      %28 = dma.done [#allocation5], 8192
    $region17: #{tpu_custom_call.1} parent=1 // pred_fallthru
      _
    %p29 = scmp.eq.s32.totalorder 0, 0
    // Predicated region
    $region18: #{tpu_custom_call.1} parent=1 // pred_check
      %p30 = pneg %p29
    $region19: #{tpu_custom_call.1} parent=1 // pred_check_branch
      %32 = sbr.rel (%p30) target = $region21
    $region20: #{tpu_custom_call.1} parent=1 // pred_region
      %vm33 = vcmask 261120
      %34 = vst.msk [vmem:[#allocation2] sm:$0xff] %vm33, 0.0
      %35 = vst.msk [vmem:[#allocation3] sm:$0xff] %vm33, -inf
    $region21: #{tpu_custom_call.1} parent=1 // pred_fallthru
      _
    %v36 = vld [vmem:[#allocation4] sm:$0xff]
    %v37 = vld [vmem:[#allocation4 + $0x8] sm:$0xff]
    %v38 = vld [vmem:[#allocation4 + $0x10] sm:$0xff]
    %v39 = vld [vmem:[#allocation4 + $0x18] sm:$0xff]
    %v40 = vld [vmem:[#allocation4 + $0x20] sm:$0xff]
    %v41 = vld [vmem:[#allocation4 + $0x28] sm:$0xff]
    %v42 = vld [vmem:[#allocation4 + $0x30] sm:$0xff]
    %v43 = vld [vmem:[#allocation4 + $0x38] sm:$0xff]
    %v44 = vld [vmem:[#allocation4 + $0x40] sm:$0xff]
    %v45 = vld [vmem:[#allocation4 + $0x48] sm:$0xff]
    %v46 = vld [vmem:[#allocation4 + $0x50] sm:$0xff]
    %v47 = vld [vmem:[#allocation4 + $0x58] sm:$0xff]
    %v48 = vld [vmem:[#allocation4 + $0x60] sm:$0xff]
    %v49 = vld [vmem:[#allocation4 + $0x68] sm:$0xff]
    %v50 = vld [vmem:[#allocation4 + $0x70] sm:$0xff]
    %v51 = vld [vmem:[#allocation4 + $0x78] sm:$0xff]
    %v52 = vld [vmem:[#allocation4 + $0x80] sm:$0xff]
    %v53 = vld [vmem:[#allocation4 + $0x88] sm:$0xff]
    %v54 = vld [vmem:[#allocation4 + $0x90] sm:$0xff]
    %v55 = vld [vmem:[#allocation4 + $0x98] sm:$0xff]
    %v56 = vld [vmem:[#allocation4 + $0xa0] sm:$0xff]
    %v57 = vld [vmem:[#allocation4 + $0xa8] sm:$0xff]
    %v58 = vld [vmem:[#allocation4 + $0xb0] sm:$0xff]
    %v59 = vld [vmem:[#allocation4 + $0xb8] sm:$0xff]
    %v60 = vld [vmem:[#allocation4 + $0xc0] sm:$0xff]
    %v61 = vld [vmem:[#allocation4 + $0xc8] sm:$0xff]
    %v62 = vld [vmem:[#allocation4 + $0xd0] sm:$0xff]
    %v63 = vld [vmem:[#allocation4 + $0xd8] sm:$0xff]
    %v64 = vld [vmem:[#allocation4 + $0xe0] sm:$0xff]
    %v65 = vld [vmem:[#allocation4 + $0xe8] sm:$0xff]
    %v66 = vld [vmem:[#allocation4 + $0xf0] sm:$0xff]
    %v67 = vld [vmem:[#allocation4 + $0xf8] sm:$0xff]
    %v68 = vld [vmem:[#allocation4 + $0x100] sm:$0xff]
    %v69 = vld [vmem:[#allocation4 + $0x108] sm:$0xff]
    %v70 = vld [vmem:[#allocation4 + $0x110] sm:$0xff]
    %v71 = vld [vmem:[#allocation4 + $0x118] sm:$0xff]
    %v72 = vld [vmem:[#allocation4 + $0x120] sm:$0xff]
    %v73 = vld [vmem:[#allocation4 + $0x128] sm:$0xff]
    %v74 = vld [vmem:[#allocation4 + $0x130] sm:$0xff]
    %v75 = vld [vmem:[#allocation4 + $0x138] sm:$0xff]
    %v76 = vld [vmem:[#allocation4 + $0x140] sm:$0xff]
    %v77 = vld [vmem:[#allocation4 + $0x148] sm:$0xff]
    %v78 = vld [vmem:[#allocation4 + $0x150] sm:$0xff]
    %v79 = vld [vmem:[#allocation4 + $0x158] sm:$0xff]
    %v80 = vld [vmem:[#allocation4 + $0x160] sm:$0xff]
    %v81 = vld [vmem:[#allocation4 + $0x168] sm:$0xff]
    %v82 = vld [vmem:[#allocation4 + $0x170] sm:$0xff]
    %v83 = vld [vmem:[#allocation4 + $0x178] sm:$0xff]
    %v84 = vld [vmem:[#allocation4 + $0x180] sm:$0xff]
    %v85 = vld [vmem:[#allocation4 + $0x188] sm:$0xff]
    %v86 = vld [vmem:[#allocation4 + $0x190] sm:$0xff]
    %v87 = vld [vmem:[#allocation4 + $0x198] sm:$0xff]
    %v88 = vld [vmem:[#allocation4 + $0x1a0] sm:$0xff]
    %v89 = vld [vmem:[#allocation4 + $0x1a8] sm:$0xff]
    %v90 = vld [vmem:[#allocation4 + $0x1b0] sm:$0xff]
    %v91 = vld [vmem:[#allocation4 + $0x1b8] sm:$0xff]
    %v92 = vld [vmem:[#allocation4 + $0x1c0] sm:$0xff]
    %v93 = vld [vmem:[#allocation4 + $0x1c8] sm:$0xff]
    %v94 = vld [vmem:[#allocation4 + $0x1d0] sm:$0xff]
    %v95 = vld [vmem:[#allocation4 + $0x1d8] sm:$0xff]
    %v96 = vld [vmem:[#allocation4 + $0x1e0] sm:$0xff]
    %v97 = vld [vmem:[#allocation4 + $0x1e8] sm:$0xff]
    %v98 = vld [vmem:[#allocation4 + $0x1f0] sm:$0xff]
    %v99 = vld [vmem:[#allocation4 + $0x1f8] sm:$0xff]
    %v100 = vld [vmem:[#allocation2] sm:$0xff]
    %v101 = vadd.f32 %v36, %v37
    %102 = vadd.xlane.f32.xlu0 %v101
    %v103 = vpop.xlane.xlu0 %102
    %v104 = vadd.f32 %v38, %v39
    %105 = vadd.xlane.f32.xlu0 %v104
    %v106 = vpop.xlane.xlu0 %105
    %v107 = vadd.f32 %v40, %v41
    %108 = vadd.xlane.f32.xlu0 %v107
    %v109 = vpop.xlane.xlu0 %108
    %v110 = vadd.f32 %v42, %v43
    %111 = vadd.xlane.f32.xlu0 %v110
    %v112 = vpop.xlane.xlu0 %111
    %v113 = vadd.f32 %v44, %v45
    %114 = vadd.xlane.f32.xlu0 %v113
    %v115 = vpop.xlane.xlu0 %114
    %v116 = vadd.f32 %v46, %v47
    %117 = vadd.xlane.f32.xlu0 %v116
    %v118 = vpop.xlane.xlu0 %117
    %v119 = vadd.f32 %v48, %v49
    %120 = vadd.xlane.f32.xlu0 %v119
    %v121 = vpop.xlane.xlu0 %120
    %v122 = vadd.f32 %v50, %v51
    %123 = vadd.xlane.f32.xlu0 %v122
    %v124 = vpop.xlane.xlu0 %123
    %v125 = vadd.f32 %v52, %v53
    %126 = vadd.xlane.f32.xlu0 %v125
    %v127 = vpop.xlane.xlu0 %126
    %v128 = vadd.f32 %v54, %v55
    %129 = vadd.xlane.f32.xlu0 %v128
    %v130 = vpop.xlane.xlu0 %129
    %v131 = vadd.f32 %v56, %v57
    %132 = vadd.xlane.f32.xlu0 %v131
    %v133 = vpop.xlane.xlu0 %132
    %v134 = vadd.f32 %v58, %v59
    %135 = vadd.xlane.f32.xlu0 %v134
    %v136 = vpop.xlane.xlu0 %135
    %v137 = vadd.f32 %v60, %v61
    %138 = vadd.xlane.f32.xlu0 %v137
    %v139 = vpop.xlane.xlu0 %138
    %v140 = vadd.f32 %v62, %v63
    %141 = vadd.xlane.f32.xlu0 %v140
    %v142 = vpop.xlane.xlu0 %141
    %v143 = vadd.f32 %v64, %v65
    %144 = vadd.xlane.f32.xlu0 %v143
    %v145 = vpop.xlane.xlu0 %144
    %v146 = vadd.f32 %v66, %v67
    %147 = vadd.xlane.f32.xlu0 %v146
    %v148 = vpop.xlane.xlu0 %147
    %v149 = vadd.f32 %v68, %v69
    %150 = vadd.xlane.f32.xlu0 %v149
    %v151 = vpop.xlane.xlu0 %150
    %v152 = vadd.f32 %v70, %v71
    %153 = vadd.xlane.f32.xlu0 %v152
    %v154 = vpop.xlane.xlu0 %153
    %v155 = vadd.f32 %v72, %v73
    %156 = vadd.xlane.f32.xlu0 %v155
    %v157 = vpop.xlane.xlu0 %156
    %v158 = vadd.f32 %v74, %v75
    %159 = vadd.xlane.f32.xlu0 %v158
    %v160 = vpop.xlane.xlu0 %159
    %v161 = vadd.f32 %v76, %v77
    %162 = vadd.xlane.f32.xlu0 %v161
    %v163 = vpop.xlane.xlu0 %162
    %v164 = vadd.f32 %v78, %v79
    %165 = vadd.xlane.f32.xlu0 %v164
    %v166 = vpop.xlane.xlu0 %165
    %v167 = vadd.f32 %v80, %v81
    %168 = vadd.xlane.f32.xlu0 %v167
    %v169 = vpop.xlane.xlu0 %168
    %v170 = vadd.f32 %v82, %v83
    %171 = vadd.xlane.f32.xlu0 %v170
    %v172 = vpop.xlane.xlu0 %171
    %v173 = vadd.f32 %v84, %v85
    %174 = vadd.xlane.f32.xlu0 %v173
    %v175 = vpop.xlane.xlu0 %174
    %v176 = vadd.f32 %v86, %v87
    %177 = vadd.xlane.f32.xlu0 %v176
    %v178 = vpop.xlane.xlu0 %177
    %v179 = vadd.f32 %v88, %v89
    %180 = vadd.xlane.f32.xlu0 %v179
    %v181 = vpop.xlane.xlu0 %180
    %v182 = vadd.f32 %v90, %v91
    %183 = vadd.xlane.f32.xlu0 %v182
    %v184 = vpop.xlane.xlu0 %183
    %v185 = vadd.f32 %v92, %v93
    %186 = vadd.xlane.f32.xlu0 %v185
    %v187 = vpop.xlane.xlu0 %186
    %v188 = vadd.f32 %v94, %v95
    %189 = vadd.xlane.f32.xlu0 %v188
    %v190 = vpop.xlane.xlu0 %189
    %v191 = vadd.f32 %v96, %v97
    %192 = vadd.xlane.f32.xlu0 %v191
    %v193 = vpop.xlane.xlu0 %192
    %v194 = vadd.f32 %v98, %v99
    %195 = vadd.xlane.f32.xlu0 %v194
    %v196 = vpop.xlane.xlu0 %195
    %v229 = vlaneseq
    %v230 = vand.u32 %v229, 127
    %v231 = vlaneseq
    %v232 = vshrl.u32 %v231, 7
    %v233 = vsub.s32 %v230, %v232
    %v234 = vrot.slane %v103, %v233
    %v235 = vadd.s32 %v230, 4294967288
    %v236 = vlaneseq
    %v237 = vshrl.u32 %v236, 7
    %v238 = vsub.s32 %v235, %v237
    %v239 = vrot.slane %v106, %v238
    %vm240 = vcmask 130112
    %v241 = vsel %vm240, %v239, %v234
    %v242 = vadd.s32 %v230, 4294967280
    %v243 = vlaneseq
    %v244 = vshrl.u32 %v243, 7
    %v245 = vsub.s32 %v242, %v244
    %v246 = vrot.slane %v109, %v245
    %vm247 = vcmask 195712
    %v248 = vsel %vm247, %v246, %v241
    %v249 = vadd.s32 %v230, 4294967272
    %v250 = vlaneseq
    %v251 = vshrl.u32 %v250, 7
    %v252 = vsub.s32 %v249, %v251
    %v253 = vrot.slane %v112, %v252
    %vm254 = vcmask 261312
    %v255 = vsel %vm254, %v253, %v248
    %v256 = vlaneseq
    %v257 = vshrl.u32 %v256, 7
    %v258 = vsub.s32 %v230, %v257
    %v259 = vrot.slane %v115, %v258
    %v260 = vlaneseq
    %v261 = vshrl.u32 %v260, 7
    %v262 = vsub.s32 %v235, %v261
    %v263 = vrot.slane %v118, %v262
    %v264 = vsel %vm240, %v263, %v259
    %v265 = vlaneseq
    %v266 = vshrl.u32 %v265, 7
    %v267 = vsub.s32 %v242, %v266
    %v268 = vrot.slane %v121, %v267
    %v269 = vsel %vm247, %v268, %v264
    %v270 = vlaneseq
    %v271 = vshrl.u32 %v270, 7
    %v272 = vsub.s32 %v249, %v271
    %v273 = vrot.slane %v124, %v272
    %v274 = vsel %vm254, %v273, %v269
    %v275 = vlaneseq
    %v276 = vshrl.u32 %v275, 7
    %v277 = vsub.s32 %v230, %v276
    %v278 = vrot.slane %v127, %v277
    %v279 = vlaneseq
    %v280 = vshrl.u32 %v279, 7
    %v281 = vsub.s32 %v235, %v280
    %v282 = vrot.slane %v130, %v281
    %v283 = vsel %vm240, %v282, %v278
    %v284 = vlaneseq
    %v285 = vshrl.u32 %v284, 7
    %v286 = vsub.s32 %v242, %v285
    %v287 = vrot.slane %v133, %v286
    %v288 = vsel %vm247, %v287, %v283
    %v289 = vlaneseq
    %v290 = vshrl.u32 %v289, 7
    %v291 = vsub.s32 %v249, %v290
    %v292 = vrot.slane %v136, %v291
    %v293 = vsel %vm254, %v292, %v288
    %v294 = vlaneseq
    %v295 = vshrl.u32 %v294, 7
    %v296 = vsub.s32 %v230, %v295
    %v297 = vrot.slane %v139, %v296
    %v298 = vlaneseq
    %v299 = vshrl.u32 %v298, 7
    %v300 = vsub.s32 %v235, %v299
    %v301 = vrot.slane %v142, %v300
    %v302 = vsel %vm240, %v301, %v297
    %v303 = vlaneseq
    %v304 = vshrl.u32 %v303, 7
    %v305 = vsub.s32 %v242, %v304
    %v306 = vrot.slane %v145, %v305
    %v307 = vsel %vm247, %v306, %v302
    %v308 = vlaneseq
    %v309 = vshrl.u32 %v308, 7
    %v310 = vsub.s32 %v249, %v309
    %v311 = vrot.slane %v148, %v310
    %v312 = vsel %vm254, %v311, %v307
    %v313 = vlaneseq
    %v314 = vshrl.u32 %v313, 7
    %v315 = vsub.s32 %v230, %v314
    %v316 = vrot.slane %v151, %v315
    %v317 = vlaneseq
    %v318 = vshrl.u32 %v317, 7
    %v319 = vsub.s32 %v235, %v318
    %v320 = vrot.slane %v154, %v319
    %v321 = vsel %vm240, %v320, %v316
    %v322 = vlaneseq
    %v323 = vshrl.u32 %v322, 7
    %v324 = vsub.s32 %v242, %v323
    %v325 = vrot.slane %v157, %v324
    %v326 = vsel %vm247, %v325, %v321
    %v327 = vlaneseq
    %v328 = vshrl.u32 %v327, 7
    %v329 = vsub.s32 %v249, %v328
    %v330 = vrot.slane %v160, %v329
    %v331 = vsel %vm254, %v330, %v326
    %v332 = vlaneseq
    %v333 = vshrl.u32 %v332, 7
    %v334 = vsub.s32 %v230, %v333
    %v335 = vrot.slane %v163, %v334
    %v336 = vlaneseq
    %v337 = vshrl.u32 %v336, 7
    %v338 = vsub.s32 %v235, %v337
    %v339 = vrot.slane %v166, %v338
    %v340 = vsel %vm240, %v339, %v335
    %v341 = vlaneseq
    %v342 = vshrl.u32 %v341, 7
    %v343 = vsub.s32 %v242, %v342
    %v344 = vrot.slane %v169, %v343
    %v345 = vsel %vm247, %v344, %v340
    %v346 = vlaneseq
    %v347 = vshrl.u32 %v346, 7
    %v348 = vsub.s32 %v249, %v347
    %v349 = vrot.slane %v172, %v348
    %v350 = vsel %vm254, %v349, %v345
    %v351 = vlaneseq
    %v352 = vshrl.u32 %v351, 7
    %v353 = vsub.s32 %v230, %v352
    %v354 = vrot.slane %v175, %v353
    %v355 = vlaneseq
    %v356 = vshrl.u32 %v355, 7
    %v357 = vsub.s32 %v235, %v356
    %v358 = vrot.slane %v178, %v357
    %v359 = vsel %vm240, %v358, %v354
    %v360 = vlaneseq
    %v361 = vshrl.u32 %v360, 7
    %v362 = vsub.s32 %v242, %v361
    %v363 = vrot.slane %v181, %v362
    %v364 = vsel %vm247, %v363, %v359
    %v365 = vlaneseq
    %v366 = vshrl.u32 %v365, 7
    %v367 = vsub.s32 %v249, %v366
    %v368 = vrot.slane %v184, %v367
    %v369 = vsel %vm254, %v368, %v364
    %v370 = vlaneseq
    %v371 = vshrl.u32 %v370, 7
    %v372 = vsub.s32 %v230, %v371
    %v373 = vrot.slane %v187, %v372
    %v374 = vlaneseq
    %v375 = vshrl.u32 %v374, 7
    %v376 = vsub.s32 %v235, %v375
    %v377 = vrot.slane %v190, %v376
    %v378 = vsel %vm240, %v377, %v373
    %v379 = vlaneseq
    %v380 = vshrl.u32 %v379, 7
    %v381 = vsub.s32 %v242, %v380
    %v382 = vrot.slane %v193, %v381
    %v383 = vsel %vm247, %v382, %v378
    %v384 = vlaneseq
    %v385 = vshrl.u32 %v384, 7
    %v386 = vsub.s32 %v249, %v385
    %v387 = vrot.slane %v196, %v386
    %v388 = vsel %vm254, %v387, %v383
    %vm389 = vcmask 1041409
    %v390 = vsel %vm389, %v274, %v255
    %vm391 = vcmask 1042434
    %v392 = vsel %vm391, %v293, %v390
    %vm393 = vcmask 1043459
    %v394 = vsel %vm393, %v312, %v392
    %vm395 = vcmask 1044484
    %v396 = vsel %vm395, %v331, %v394
    %vm397 = vcmask 1045509
    %v398 = vsel %vm397, %v350, %v396
    %vm399 = vcmask 1046534
    %v400 = vsel %vm399, %v369, %v398
    %vm401 = vcmask 1047559
    %v402 = vsel %vm401, %v388, %v400
    %v404 = vadd.f32 %v100, %v402
    %vm405 = vcmask 261120
    %406 = vst.msk [vmem:[#allocation2] sm:$0xff] %vm405, %v404
    %v407 = vld [vmem:[#allocation3] sm:$0xff]
    %v408 = vmax.f32 %v36, %v37
    %409 = vmax.xlane.f32.xlu0 %v408
    %v410 = vpop.xlane.xlu0 %409
    %v411 = vmax.f32 %v38, %v39
    %412 = vmax.xlane.f32.xlu0 %v411
    %v413 = vpop.xlane.xlu0 %412
    %v414 = vmax.f32 %v40, %v41
    %415 = vmax.xlane.f32.xlu0 %v414
    %v416 = vpop.xlane.xlu0 %415
    %v417 = vmax.f32 %v42, %v43
    %418 = vmax.xlane.f32.xlu0 %v417
    %v419 = vpop.xlane.xlu0 %418
    %v420 = vmax.f32 %v44, %v45
    %421 = vmax.xlane.f32.xlu0 %v420
    %v422 = vpop.xlane.xlu0 %421
    %v423 = vmax.f32 %v46, %v47
    %424 = vmax.xlane.f32.xlu0 %v423
    %v425 = vpop.xlane.xlu0 %424
    %v426 = vmax.f32 %v48, %v49
    %427 = vmax.xlane.f32.xlu0 %v426
    %v428 = vpop.xlane.xlu0 %427
    %v429 = vmax.f32 %v50, %v51
    %430 = vmax.xlane.f32.xlu0 %v429
    %v431 = vpop.xlane.xlu0 %430
    %v432 = vmax.f32 %v52, %v53
    %433 = vmax.xlane.f32.xlu0 %v432
    %v434 = vpop.xlane.xlu0 %433
    %v435 = vmax.f32 %v54, %v55
    %436 = vmax.xlane.f32.xlu0 %v435
    %v437 = vpop.xlane.xlu0 %436
    %v438 = vmax.f32 %v56, %v57
    %439 = vmax.xlane.f32.xlu0 %v438
    %v440 = vpop.xlane.xlu0 %439
    %v441 = vmax.f32 %v58, %v59
    %442 = vmax.xlane.f32.xlu0 %v441
    %v443 = vpop.xlane.xlu0 %442
    %v444 = vmax.f32 %v60, %v61
    %445 = vmax.xlane.f32.xlu0 %v444
    %v446 = vpop.xlane.xlu0 %445
    %v447 = vmax.f32 %v62, %v63
    %448 = vmax.xlane.f32.xlu0 %v447
    %v449 = vpop.xlane.xlu0 %448
    %v450 = vmax.f32 %v64, %v65
    %451 = vmax.xlane.f32.xlu0 %v450
    %v452 = vpop.xlane.xlu0 %451
    %v453 = vmax.f32 %v66, %v67
    %454 = vmax.xlane.f32.xlu0 %v453
    %v455 = vpop.xlane.xlu0 %454
    %v456 = vmax.f32 %v68, %v69
    %457 = vmax.xlane.f32.xlu0 %v456
    %v458 = vpop.xlane.xlu0 %457
    %v459 = vmax.f32 %v70, %v71
    %460 = vmax.xlane.f32.xlu0 %v459
    %v461 = vpop.xlane.xlu0 %460
    %v462 = vmax.f32 %v72, %v73
    %463 = vmax.xlane.f32.xlu0 %v462
    %v464 = vpop.xlane.xlu0 %463
    %v465 = vmax.f32 %v74, %v75
    %466 = vmax.xlane.f32.xlu0 %v465
    %v467 = vpop.xlane.xlu0 %466
    %v468 = vmax.f32 %v76, %v77
    %469 = vmax.xlane.f32.xlu0 %v468
    %v470 = vpop.xlane.xlu0 %469
    %v471 = vmax.f32 %v78, %v79
    %472 = vmax.xlane.f32.xlu0 %v471
    %v473 = vpop.xlane.xlu0 %472
    %v474 = vmax.f32 %v80, %v81
    %475 = vmax.xlane.f32.xlu0 %v474
    %v476 = vpop.xlane.xlu0 %475
    %v477 = vmax.f32 %v82, %v83
    %478 = vmax.xlane.f32.xlu0 %v477
    %v479 = vpop.xlane.xlu0 %478
    %v480 = vmax.f32 %v84, %v85
    %481 = vmax.xlane.f32.xlu0 %v480
    %v482 = vpop.xlane.xlu0 %481
    %v483 = vmax.f32 %v86, %v87
    %484 = vmax.xlane.f32.xlu0 %v483
    %v485 = vpop.xlane.xlu0 %484
    %v486 = vmax.f32 %v88, %v89
    %487 = vmax.xlane.f32.xlu0 %v486
    %v488 = vpop.xlane.xlu0 %487
    %v489 = vmax.f32 %v90, %v91
    %490 = vmax.xlane.f32.xlu0 %v489
    %v491 = vpop.xlane.xlu0 %490
    %v492 = vmax.f32 %v92, %v93
    %493 = vmax.xlane.f32.xlu0 %v492
    %v494 = vpop.xlane.xlu0 %493
    %v495 = vmax.f32 %v94, %v95
    %496 = vmax.xlane.f32.xlu0 %v495
    %v497 = vpop.xlane.xlu0 %496
    %v498 = vmax.f32 %v96, %v97
    %499 = vmax.xlane.f32.xlu0 %v498
    %v500 = vpop.xlane.xlu0 %499
    %v501 = vmax.f32 %v98, %v99
    %502 = vmax.xlane.f32.xlu0 %v501
    %v503 = vpop.xlane.xlu0 %502
    %v536 = vlaneseq
    %v537 = vshrl.u32 %v536, 7
    %v538 = vsub.s32 %v230, %v537
    %v539 = vrot.slane %v410, %v538
    %v540 = vlaneseq
    %v541 = vshrl.u32 %v540, 7
    %v542 = vsub.s32 %v235, %v541
    %v543 = vrot.slane %v413, %v542
    %v544 = vsel %vm240, %v543, %v539
    %v545 = vlaneseq
    %v546 = vshrl.u32 %v545, 7
    %v547 = vsub.s32 %v242, %v546
    %v548 = vrot.slane %v416, %v547
    %v549 = vsel %vm247, %v548, %v544
    %v550 = vlaneseq
    %v551 = vshrl.u32 %v550, 7
    %v552 = vsub.s32 %v249, %v551
    %v553 = vrot.slane %v419, %v552
    %v554 = vsel %vm254, %v553, %v549
    %v555 = vlaneseq
    %v556 = vshrl.u32 %v555, 7
    %v557 = vsub.s32 %v230, %v556
    %v558 = vrot.slane %v422, %v557
    %v559 = vlaneseq
    %v560 = vshrl.u32 %v559, 7
    %v561 = vsub.s32 %v235, %v560
    %v562 = vrot.slane %v425, %v561
    %v563 = vsel %vm240, %v562, %v558
    %v564 = vlaneseq
    %v565 = vshrl.u32 %v564, 7
    %v566 = vsub.s32 %v242, %v565
    %v567 = vrot.slane %v428, %v566
    %v568 = vsel %vm247, %v567, %v563
    %v569 = vlaneseq
    %v570 = vshrl.u32 %v569, 7
    %v571 = vsub.s32 %v249, %v570
    %v572 = vrot.slane %v431, %v571
    %v573 = vsel %vm254, %v572, %v568
    %v574 = vlaneseq
    %v575 = vshrl.u32 %v574, 7
    %v576 = vsub.s32 %v230, %v575
    %v577 = vrot.slane %v434, %v576
    %v578 = vlaneseq
    %v579 = vshrl.u32 %v578, 7
    %v580 = vsub.s32 %v235, %v579
    %v581 = vrot.slane %v437, %v580
    %v582 = vsel %vm240, %v581, %v577
    %v583 = vlaneseq
    %v584 = vshrl.u32 %v583, 7
    %v585 = vsub.s32 %v242, %v584
    %v586 = vrot.slane %v440, %v585
    %v587 = vsel %vm247, %v586, %v582
    %v588 = vlaneseq
    %v589 = vshrl.u32 %v588, 7
    %v590 = vsub.s32 %v249, %v589
    %v591 = vrot.slane %v443, %v590
    %v592 = vsel %vm254, %v591, %v587
    %v593 = vlaneseq
    %v594 = vshrl.u32 %v593, 7
    %v595 = vsub.s32 %v230, %v594
    %v596 = vrot.slane %v446, %v595
    %v597 = vlaneseq
    %v598 = vshrl.u32 %v597, 7
    %v599 = vsub.s32 %v235, %v598
    %v600 = vrot.slane %v449, %v599
    %v601 = vsel %vm240, %v600, %v596
    %v602 = vlaneseq
    %v603 = vshrl.u32 %v602, 7
    %v604 = vsub.s32 %v242, %v603
    %v605 = vrot.slane %v452, %v604
    %v606 = vsel %vm247, %v605, %v601
    %v607 = vlaneseq
    %v608 = vshrl.u32 %v607, 7
    %v609 = vsub.s32 %v249, %v608
    %v610 = vrot.slane %v455, %v609
    %v611 = vsel %vm254, %v610, %v606
    %v612 = vlaneseq
    %v613 = vshrl.u32 %v612, 7
    %v614 = vsub.s32 %v230, %v613
    %v615 = vrot.slane %v458, %v614
    %v616 = vlaneseq
    %v617 = vshrl.u32 %v616, 7
    %v618 = vsub.s32 %v235, %v617
    %v619 = vrot.slane %v461, %v618
    %v620 = vsel %vm240, %v619, %v615
    %v621 = vlaneseq
    %v622 = vshrl.u32 %v621, 7
    %v623 = vsub.s32 %v242, %v622
    %v624 = vrot.slane %v464, %v623
    %v625 = vsel %vm247, %v624, %v620
    %v626 = vlaneseq
    %v627 = vshrl.u32 %v626, 7
    %v628 = vsub.s32 %v249, %v627
    %v629 = vrot.slane %v467, %v628
    %v630 = vsel %vm254, %v629, %v625
    %v631 = vlaneseq
    %v632 = vshrl.u32 %v631, 7
    %v633 = vsub.s32 %v230, %v632
    %v634 = vrot.slane %v470, %v633
    %v635 = vlaneseq
    %v636 = vshrl.u32 %v635, 7
    %v637 = vsub.s32 %v235, %v636
    %v638 = vrot.slane %v473, %v637
    %v639 = vsel %vm240, %v638, %v634
    %v640 = vlaneseq
    %v641 = vshrl.u32 %v640, 7
    %v642 = vsub.s32 %v242, %v641
    %v643 = vrot.slane %v476, %v642
    %v644 = vsel %vm247, %v643, %v639
    %v645 = vlaneseq
    %v646 = vshrl.u32 %v645, 7
    %v647 = vsub.s32 %v249, %v646
    %v648 = vrot.slane %v479, %v647
    %v649 = vsel %vm254, %v648, %v644
    %v650 = vlaneseq
    %v651 = vshrl.u32 %v650, 7
    %v652 = vsub.s32 %v230, %v651
    %v653 = vrot.slane %v482, %v652
    %v654 = vlaneseq
    %v655 = vshrl.u32 %v654, 7
    %v656 = vsub.s32 %v235, %v655
    %v657 = vrot.slane %v485, %v656
    %v658 = vsel %vm240, %v657, %v653
    %v659 = vlaneseq
    %v660 = vshrl.u32 %v659, 7
    %v661 = vsub.s32 %v242, %v660
    %v662 = vrot.slane %v488, %v661
    %v663 = vsel %vm247, %v662, %v658
    %v664 = vlaneseq
    %v665 = vshrl.u32 %v664, 7
    %v666 = vsub.s32 %v249, %v665
    %v667 = vrot.slane %v491, %v666
    %v668 = vsel %vm254, %v667, %v663
    %v669 = vlaneseq
    %v670 = vshrl.u32 %v669, 7
    %v671 = vsub.s32 %v230, %v670
    %v672 = vrot.slane %v494, %v671
    %v673 = vlaneseq
    %v674 = vshrl.u32 %v673, 7
    %v675 = vsub.s32 %v235, %v674
    %v676 = vrot.slane %v497, %v675
    %v677 = vsel %vm240, %v676, %v672
    %v678 = vlaneseq
    %v679 = vshrl.u32 %v678, 7
    %v680 = vsub.s32 %v242, %v679
    %v681 = vrot.slane %v500, %v680
    %v682 = vsel %vm247, %v681, %v677
    %v683 = vlaneseq
    %v684 = vshrl.u32 %v683, 7
    %v685 = vsub.s32 %v249, %v684
    %v686 = vrot.slane %v503, %v685
    %v687 = vsel %vm254, %v686, %v682
    %v688 = vsel %vm389, %v573, %v554
    %v689 = vsel %vm391, %v592, %v688
    %v690 = vsel %vm393, %v611, %v689
    %v691 = vsel %vm395, %v630, %v690
    %v692 = vsel %vm397, %v649, %v691
    %v693 = vsel %vm399, %v668, %v692
    %v694 = vsel %vm401, %v687, %v693
    %v696 = vmax.f32 %v407, %v694
    %697 = vst.msk [vmem:[#allocation3] sm:$0xff] %vm405, %v696
    // Predicated region
    $region22: #{tpu_custom_call.1} parent=1 // pred_check
      %p698 = pneg %p29
    $region23: #{tpu_custom_call.1} parent=1 // pred_check_branch
      %700 = sbr.rel (%p698) target = $region25
    $region24: #{tpu_custom_call.1} parent=1 // pred_region
      %v701 = vld [vmem:[#allocation2] sm:$0xff]
      %v702 = vmul.f32 %v701, 0.00390625
      %v703 = vld [vmem:[#allocation3] sm:$0xff]
      %v704 = vld [vmem:[%s1] sm:$0x3]
      %v706 = vsel %vm405, %v702, 0
      %v709 = vsel %vm405, %v703, 0
      %v712 = vsel %vm405, %v704, 0
      %714 = vmatprep.subr.mxu0 0.0
      %715 = vmatpush1.xpose.msra.mxu0 %v712
      %716 = vmatprep.subr.mxu0 0.0
      %717 = vmatpush1.xpose.msra.mxu0 0.0
      %718 = vmatprep.subr.mxu0 0.0
      %719 = vmatpush1.xpose.msra.mxu0 0.0
      %720 = vmatprep.subr.mxu0 0.0
      %721 = vmatpush1.xpose.msra.mxu0 0.0
      %722 = vmatprep.subr.mxu0 0.0
      %723 = vmatpush1.xpose.msra.mxu0 0.0
      %724 = vmatprep.subr.mxu0 0.0
      %725 = vmatpush1.xpose.msra.mxu0 0.0
      %726 = vmatprep.subr.mxu0 0.0
      %727 = vmatpush1.xpose.msra.mxu0 0.0
      %728 = vmatprep.subr.mxu0 0.0
      %729 = vmatpush1.xpose.msra.mxu0 0.0
      %730 = vmatprep.subr.mxu0 0.0
      %731 = vmatpush1.xpose.msra.mxu0 0.0
      %732 = vmatprep.subr.mxu0 0.0
      %733 = vmatpush1.xpose.msra.mxu0 0.0
      %734 = vmatprep.subr.mxu0 0.0
      %735 = vmatpush1.xpose.msra.mxu0 0.0
      %736 = vmatprep.subr.mxu0 0.0
      %737 = vmatpush1.xpose.msra.mxu0 0.0
      %738 = vmatprep.subr.mxu0 0.0
      %739 = vmatpush1.xpose.msra.mxu0 0.0
      %740 = vmatprep.subr.mxu0 0.0
      %741 = vmatpush1.xpose.msra.mxu0 0.0
      %742 = vmatprep.subr.mxu0 0.0
      %743 = vmatpush1.xpose.msra.mxu0 0.0
      %744 = vmatprep.subr.mxu0 0.0
      %745 = vmatpush1.xpose.msra.mxu0 0.0
      %746 = vmatprep.subr.mxu0 0.0
      %747 = vmatpush1.xpose.msra.mxu0 0.0
      %748 = vmatprep.subr.mxu0 0.0
      %749 = vmatpush1.xpose.msra.mxu0 0.0
      %750 = vmatprep.subr.mxu0 0.0
      %751 = vmatpush1.xpose.msra.mxu0 0.0
      %752 = vmatprep.subr.mxu0 0.0
      %753 = vmatpush1.xpose.msra.mxu0 0.0
      %754 = vmatprep.subr.mxu0 0.0
      %755 = vmatpush1.xpose.msra.mxu0 0.0
      %756 = vmatprep.subr.mxu0 0.0
      %757 = vmatpush1.xpose.msra.mxu0 0.0
      %758 = vmatprep.subr.mxu0 0.0
      %759 = vmatpush1.xpose.msra.mxu0 0.0
      %760 = vmatprep.subr.mxu0 0.0
      %761 = vmatpush1.xpose.msra.mxu0 0.0
      %762 = vmatprep.subr.mxu0 0.0
      %763 = vmatpush1.xpose.msra.mxu0 0.0
      %764 = vmatprep.subr.mxu0 0.0
      %765 = vmatpush1.xpose.msra.mxu0 0.0
      %766 = vmatprep.subr.mxu0 0.0
      %767 = vmatpush1.xpose.msra.mxu0 0.0
      %768 = vmatprep.subr.mxu0 0.0
      %769 = vmatpush1.xpose.msra.mxu0 0.0
      %770 = vmatprep.subr.mxu0 0.0
      %771 = vmatpush1.xpose.msra.mxu0 0.0
      %772 = vmatprep.subr.mxu0 0.0
      %773 = vmatpush1.xpose.msra.mxu0 0.0
      %774 = vmatprep.subr.mxu0 0.0
      %775 = vmatpush1.xpose.msra.mxu0 0.0
      %776 = vmatprep.subr.mxu0 0.0
      %777 = vmatpush1.xpose.msra.mxu0 0.0
      %778 = vmatprep.mubr.f32.mxu0 0.0
      %779 = vmatmul.mubr.f32.gmra.mrb[0].mxu0 %v706
      %v780 = vpop.f32.mrb[0].mxu0
      %v781 = vadd.f32 0.0, %v780
      %v782 = vpop.f32.mrb[0].mxu0
      %783 = vmatprep.mubr.f32.mxu0 0.0
      %784 = vmatmul.mubr.f32.gmra.mrb[0].mxu0 %v709
      %v785 = vpop.f32.mrb[0].mxu0
      %v786 = vadd.f32 0.0, %v785
      %v787 = vpop.f32.mrb[0].mxu0
      %788 = vdwg.mxu0
      %v789 = vmax.f32 %v781, 0.0
      %v790 = vmax.f32 %v786, 0.0
      %v791 = vadd.f32 %v789, %v790
      %v792 = vld [vmem:[%s2] sm:$0xff]
      %v793 = vld [vmem:[%s2 + $0x8] sm:$0xff]
      %v794 = vld [vmem:[%s2 + $0x10] sm:$0xff]
      %v795 = vld [vmem:[%s2 + $0x18] sm:$0xff]
      %vm796 = vcmask 15360
      %v798 = vsel %vm796, %v791, 0
      %v801 = vsel %vm796, %v792, 0
      %v804 = vsel %vm796, %v793, 0
      %v807 = vsel %vm796, %v794, 0
      %v810 = vsel %vm796, %v795, 0
      %812 = vmatprep.subr.mxu0 0.0
      %813 = vmatpush1.xpose.msra.mxu0 %v801
      %814 = vmatprep.subr.mxu0 0.0
      %815 = vmatpush1.xpose.msra.mxu0 %v804
      %816 = vmatprep.subr.mxu0 0.0
      %817 = vmatpush1.xpose.msra.mxu0 %v807
      %818 = vmatprep.subr.mxu0 0.0
      %819 = vmatpush1.xpose.msra.mxu0 %v810
      %820 = vmatprep.subr.mxu0 0.0
      %821 = vmatpush1.xpose.msra.mxu0 0.0
      %822 = vmatprep.subr.mxu0 0.0
      %823 = vmatpush1.xpose.msra.mxu0 0.0
      %824 = vmatprep.subr.mxu0 0.0
      %825 = vmatpush1.xpose.msra.mxu0 0.0
      %826 = vmatprep.subr.mxu0 0.0
      %827 = vmatpush1.xpose.msra.mxu0 0.0
      %828 = vmatprep.subr.mxu0 0.0
      %829 = vmatpush1.xpose.msra.mxu0 0.0
      %830 = vmatprep.subr.mxu0 0.0
      %831 = vmatpush1.xpose.msra.mxu0 0.0
      %832 = vmatprep.subr.mxu0 0.0
      %833 = vmatpush1.xpose.msra.mxu0 0.0
      %834 = vmatprep.subr.mxu0 0.0
      %835 = vmatpush1.xpose.msra.mxu0 0.0
      %836 = vmatprep.subr.mxu0 0.0
      %837 = vmatpush1.xpose.msra.mxu0 0.0
      %838 = vmatprep.subr.mxu0 0.0
      %839 = vmatpush1.xpose.msra.mxu0 0.0
      %840 = vmatprep.subr.mxu0 0.0
      %841 = vmatpush1.xpose.msra.mxu0 0.0
      %842 = vmatprep.subr.mxu0 0.0
      %843 = vmatpush1.xpose.msra.mxu0 0.0
      %844 = vmatprep.subr.mxu0 0.0
      %845 = vmatpush1.xpose.msra.mxu0 0.0
      %846 = vmatprep.subr.mxu0 0.0
      %847 = vmatpush1.xpose.msra.mxu0 0.0
      %848 = vmatprep.subr.mxu0 0.0
      %849 = vmatpush1.xpose.msra.mxu0 0.0
      %850 = vmatprep.subr.mxu0 0.0
      %851 = vmatpush1.xpose.msra.mxu0 0.0
      %852 = vmatprep.subr.mxu0 0.0
      %853 = vmatpush1.xpose.msra.mxu0 0.0
      %854 = vmatprep.subr.mxu0 0.0
      %855 = vmatpush1.xpose.msra.mxu0 0.0
      %856 = vmatprep.subr.mxu0 0.0
      %857 = vmatpush1.xpose.msra.mxu0 0.0
      %858 = vmatprep.subr.mxu0 0.0
      %859 = vmatpush1.xpose.msra.mxu0 0.0
      %860 = vmatprep.subr.mxu0 0.0
      %861 = vmatpush1.xpose.msra.mxu0 0.0
      %862 = vmatprep.subr.mxu0 0.0
      %863 = vmatpush1.xpose.msra.mxu0 0.0
      %864 = vmatprep.subr.mxu0 0.0
      %865 = vmatpush1.xpose.msra.mxu0 0.0
      %866 = vmatprep.subr.mxu0 0.0
      %867 = vmatpush1.xpose.msra.mxu0 0.0
      %868 = vmatprep.subr.mxu0 0.0
      %869 = vmatpush1.xpose.msra.mxu0 0.0
      %870 = vmatprep.subr.mxu0 0.0
      %871 = vmatpush1.xpose.msra.mxu0 0.0
      %872 = vmatprep.subr.mxu0 0.0
      %873 = vmatpush1.xpose.msra.mxu0 0.0
      %874 = vmatprep.subr.mxu0 0.0
      %875 = vmatpush1.xpose.msra.mxu0 0.0
      %876 = vmatprep.mubr.f32.mxu0 0.0
      %877 = vmatmul.mubr.f32.gmra.mrb[0].mxu0 %v798
      %v878 = vpop.f32.mrb[0].mxu0
      %v879 = vadd.f32 0.0, %v878
      %v880 = vpop.f32.mrb[0].mxu0
      %881 = vdwg.mxu0
      %v882 = vxor.u32 %v879, 2147483648
      %v883 = vmul.f32 %v882, 1.442695
      %v884 = vpow.pop %v883
      %v885 = vadd.f32 %v884, 1.0
      %v886 = vrcp.pop %v885
      %v887 = vmul.f32 1.0, %v886
      %888 = vst.msk [vmem:[#allocation7] sm:$0xff] %vm405, %v887
    $region25: #{tpu_custom_call.1} parent=1 // pred_fallthru
      _
    // Predicated region
    $region26: #{tpu_custom_call.1} parent=1 // pred_check
      _
    $region27: #{tpu_custom_call.1} parent=1 // pred_check_branch
      %890 = sbr.rel (0) target = $region29
    $region28: #{tpu_custom_call.1} parent=1 // pred_region
      %s892 = ssub.s32 128, 128
      %893 = vsyncadd [#allocation6], %s892
      %s895 = sshll.u32 [#allocation7], 4
      %s896 = int_to_ptr.vmem [resolvable:$true] %s895
      %898 = dma.vmem_to_hbm [thread:$0]  %s896, 128, %s3, [#allocation6]
    $region29: #{tpu_custom_call.1} parent=1 // pred_fallthru
      _
    // Predicated region
    $region30: #{tpu_custom_call.1} parent=1 // pred_check
      _
    $region31: #{tpu_custom_call.1} parent=1 // pred_check_branch
      %900 = sbr.rel (0) target = $region33
    $region32: #{tpu_custom_call.1} parent=1 // pred_region
      %901 = dma.done [#allocation6], 128
    $region33: #{tpu_custom_call.1} parent=1 // pred_fallthru
      _
    %902 = vsyncpa [#allocation5], 1
    %903 = vsyncpa [#allocation6], 1

</llo_original>
